<compile_context>
chip_gen: v7x
topology: tpu7x:2x2x1
jax: 0.10.0
libtpu: 0.0.40
codegen_flags: <defaults>
</compile_context>

<pallas_src>
import functools

import jax
import jax.numpy as jnp
from jax import lax
from jax.experimental import pallas as pl
from jax.experimental.pallas import tpu as pltpu  # noqa: F401  (TPU backend)

INPUT_SIZE = 10
HIDDEN_SIZE = 32
NUM_LAYERS = 1  # single layer, matching the spec


def _lstm_kernel(x_ref, wih_ref, whh_ref, b_ref, out_ref, *, B, T, I, H):
    """Whole-sequence LSTM in one kernel invocation.

    x_ref   : (B*T, I)  batch-major input slab, f32 (row = b*T + t)
    wih_ref : (I, 4H)   W_ih^T with i/f/o columns pre-scaled by 0.5, f32
    whh_ref : (H, 4H)   W_hh^T with i/f/o columns pre-scaled by 0.5, bf16
    b_ref   : (1, 4H)   (b_ih + b_hh) with i/f/o entries pre-scaled by 0.5, f32
    out_ref : (B, T*H)  lane-dense hidden states, one full-block writeback
    """
    G = 4 * H

    # Hoisted input projection (off the recurrent critical path): one
    # lane-dense (B*T, I) x (I, 128) MXU pass.
    xw = jnp.dot(x_ref[...], wih_ref[...],
                 preferred_element_type=jnp.float32) + b_ref[...]      # (B*T, G)
    xw = xw.reshape(B, T, G)                                           # split rows only

    whh = whh_ref[...]                                                 # bf16 (H, G)

    h = jnp.zeros((B, H), jnp.float32)
    c = jnp.zeros((B, H), jnp.float32)
    hs = []

    # T = 8: fully unrolled static loop; h/c live in vregs, no scratch traffic.
    for t in range(T):
        # Only the recurrent matmul sits on the serial chain.  bf16 x bf16
        # with f32 accumulation -> single MXU pass per step.
        gates = xw[:, t, :] + jnp.dot(h.astype(jnp.bfloat16), whh,
                                      preferred_element_type=jnp.float32)  # (B, G)

        # Single 128-lane tanh per step (i/f/o columns were pre-scaled by 0.5,
        # so sigmoid(z) = 0.5*tanh(z/2) + 0.5 = 0.5*t + 0.5).
        tg = jnp.tanh(gates)
        i_g = 0.5 * tg[:, 0 * H:1 * H] + 0.5
        f_g = 0.5 * tg[:, 1 * H:2 * H] + 0.5
        g_g = tg[:, 2 * H:3 * H]
        o_g = 0.5 * tg[:, 3 * H:4 * H] + 0.5

        c = f_g * c + i_g * g_g
        h = o_g * jnp.tanh(c)
        hs.append(h)

    # Coalesced, lane-dense (B, T*H) = (2, 256) store: one unmasked full-block
    # write, stores stay completely off the recurrent chain.
    out_ref[...] = jnp.concatenate(hs, axis=1).astype(out_ref.dtype)


@jax.jit
def lstm_forward(x_btI, w_ih, w_hh, b_ih, b_hh):
    """x_btI: (B, T, I) batch-first, like PyTorch. Returns out: (B, T, H)."""
    B, T, I = x_btI.shape
    H = w_hh.shape[1]  # w_hh: (4H, H)
    G = 4 * H

    # Fold the sigmoid-as-tanh 0.5 pre-scaling into the i/f/o gate columns of
    # the transposed weights and the combined bias.  Gate order: [i, f, g, o].
    scale = jnp.concatenate([
        jnp.full((H,), 0.5, jnp.float32),
        jnp.full((H,), 0.5, jnp.float32),
        jnp.ones((H,), jnp.float32),
        jnp.full((H,), 0.5, jnp.float32),
    ])                                                                # (4H,)

    w_ih_t = jnp.transpose(w_ih).astype(jnp.float32) * scale          # (I, 4H) f32
    w_hh_t = (jnp.transpose(w_hh).astype(jnp.float32) * scale
              ).astype(jnp.bfloat16)                                  # (H, 4H) bf16
    bias = ((b_ih + b_hh).astype(jnp.float32) * scale).reshape(1, G)  # (1, 4H)

    # Free, transpose-less reshape to a batch-major 2-D slab (row = b*T + t).
    x_2d = x_btI.reshape(B * T, I).astype(jnp.float32)

    kernel = functools.partial(_lstm_kernel, B=B, T=T, I=I, H=H)

    # Single invocation, no grid: every operand is tiny (< 20 KB total) and
    # lives fully VMEM-resident for the whole kernel.
    out_2d = pl.pallas_call(
        kernel,
        out_shape=jax.ShapeDtypeStruct((B, T * H), x_btI.dtype),
    )(x_2d, w_ih_t, w_hh_t, bias)

    # Free row-major reshape: (B, T*H) -> (B, T, H), already batch-first.
    return out_2d.reshape(B, T, H)


def lstm_reference(x_btI, w_ih, w_hh, b_ih, b_hh):
    """Pure-JAX f32 reference matching PyTorch nn.LSTM (1 layer, batch_first)."""
    B, T, I = x_btI.shape
    H = w_hh.shape[1]
    x_tbi = jnp.transpose(x_btI, (1, 0, 2)).astype(jnp.float32)

    def step(carry, x_t):
        h, c = carry
        gates = x_t @ w_ih.T + h @ w_hh.T + b_ih + b_hh
        i = jax.nn.sigmoid(gates[:, 0 * H:1 * H])
        f = jax.nn.sigmoid(gates[:, 1 * H:2 * H])
        g = jnp.tanh(gates[:, 2 * H:3 * H])
        o = jax.nn.sigmoid(gates[:, 3 * H:4 * H])
        c = f * c + i * g
        h = o * jnp.tanh(c)
        return (h, c), h

    h0 = jnp.zeros((B, H), jnp.float32)
    c0 = jnp.zeros((B, H), jnp.float32)
    _, hs = lax.scan(step, (h0, c0), x_tbi)
    return jnp.transpose(hs, (1, 0, 2))


if __name__ == "__main__":
    B, T, I, H = 2, 8, INPUT_SIZE, HIDDEN_SIZE

    key = jax.random.PRNGKey(0)
    k_x, k_wih, k_whh, k_bih, k_bhh = jax.random.split(key, 5)

    # PyTorch LSTM init: uniform(-1/sqrt(H), 1/sqrt(H))
    bound = 1.0 / (H ** 0.5)
    w_ih = jax.random.uniform(k_wih, (4 * H, I), jnp.float32, -bound, bound)
    w_hh = jax.random.uniform(k_whh, (4 * H, H), jnp.float32, -bound, bound)
    b_ih = jax.random.uniform(k_bih, (4 * H,), jnp.float32, -bound, bound)
    b_hh = jax.random.uniform(k_bhh, (4 * H,), jnp.float32, -bound, bound)

    x = jax.random.normal(k_x, (B, T, I), jnp.float32)

    out = lstm_forward(x, w_ih, w_hh, b_ih, b_hh)
    out = jax.block_until_ready(out)

    ref = lstm_reference(x, w_ih, w_hh, b_ih, b_hh)
    assert out.shape == (B, T, H), out.shape
    # bf16 recurrent matmul (f32 accumulate) -> slightly looser tolerance.
    max_err = float(jnp.max(jnp.abs(out - ref)))
    assert jnp.allclose(out, ref, atol=2e-2, rtol=2e-2), (
        f"mismatch vs reference, max abs err = {max_err}")

    print("KERNEL_OK")
</pallas_src>

<mosaic_0001>
module attributes {stable_mosaic.version = 11 : i64} {
  func.func @_lstm_kernel(%arg0: memref<16x10xf32, #tpu.memory_space<vmem>>, %arg1: memref<10x128xf32, #tpu.memory_space<vmem>>, %arg2: memref<32x128xbf16, #tpu.memory_space<vmem>>, %arg3: memref<1x128xf32, #tpu.memory_space<vmem>>, %arg4: memref<2x256xf32, #tpu.memory_space<vmem>>) attributes {dimension_semantics = [], scalar_prefetch = 0 : i64, scratch_operands = 0 : i64, tpu.core_type = #tpu.core_type<tc>} {
    %c0 = arith.constant 0 : index
    %c0_0 = arith.constant 0 : index
    %0 = vector.load %arg0[%c0, %c0_0] : memref<16x10xf32, #tpu.memory_space<vmem>>, vector<16x10xf32>
    %c0_1 = arith.constant 0 : index
    %c0_2 = arith.constant 0 : index
    %1 = vector.load %arg1[%c0_1, %c0_2] : memref<10x128xf32, #tpu.memory_space<vmem>>, vector<10x128xf32>
    %cst = arith.constant dense<0.000000e+00> : vector<16x128xf32>
    %2 = tpu.matmul %0, %1, %cst {dimension_numbers = #tpu.dot_dimension_numbers<[1], [0], [0], [1], [0, 0, 1, 1], [], []>} : vector<16x10xf32>, vector<10x128xf32>, vector<16x128xf32> -> vector<16x128xf32>
    %c0_3 = arith.constant 0 : index
    %c0_4 = arith.constant 0 : index
    %3 = vector.load %arg3[%c0_3, %c0_4] : memref<1x128xf32, #tpu.memory_space<vmem>>, vector<1x128xf32>
    %4 = vector.broadcast %3 : vector<1x128xf32> to vector<16x128xf32>
    %5 = arith.addf %2, %4 : vector<16x128xf32>
    %6 = vector.shape_cast %5 : vector<16x128xf32> to vector<2x8x128xf32>
    %c0_5 = arith.constant 0 : index
    %c0_6 = arith.constant 0 : index
    %7 = vector.load %arg2[%c0_5, %c0_6] : memref<32x128xbf16, #tpu.memory_space<vmem>>, vector<32x128xbf16>
    %cst_7 = arith.constant 0.000000e+00 : f32
    %8 = vector.broadcast %cst_7 : f32 to vector<2x32xf32>
    %cst_8 = arith.constant 0.000000e+00 : f32
    %9 = vector.broadcast %cst_8 : f32 to vector<2x32xf32>
    %10 = vector.extract_strided_slice %6 {offsets = [0, 0, 0], sizes = [2, 1, 128], strides = [1, 1, 1]} : vector<2x8x128xf32> to vector<2x1x128xf32>
    %11 = vector.shape_cast %10 : vector<2x1x128xf32> to vector<2x128xf32>
    %12 = arith.truncf %8 : vector<2x32xf32> to vector<2x32xbf16>
    %cst_9 = arith.constant dense<0.000000e+00> : vector<2x128xf32>
    %13 = tpu.matmul %12, %7, %cst_9 {dimension_numbers = #tpu.dot_dimension_numbers<[1], [0], [0], [1], [0, 0, 1, 1], [], []>} : vector<2x32xbf16>, vector<32x128xbf16>, vector<2x128xf32> -> vector<2x128xf32>
    %14 = arith.addf %11, %13 : vector<2x128xf32>
    %15 = math.tanh %14 : vector<2x128xf32>
    %16 = vector.extract_strided_slice %15 {offsets = [0, 0], sizes = [2, 32], strides = [1, 1]} : vector<2x128xf32> to vector<2x32xf32>
    %cst_10 = arith.constant 5.000000e-01 : f32
    %17 = vector.broadcast %cst_10 : f32 to vector<2x32xf32>
    %18 = arith.mulf %17, %16 : vector<2x32xf32>
    %cst_11 = arith.constant 5.000000e-01 : f32
    %19 = vector.broadcast %cst_11 : f32 to vector<2x32xf32>
    %20 = arith.addf %18, %19 : vector<2x32xf32>
    %21 = vector.extract_strided_slice %15 {offsets = [0, 32], sizes = [2, 32], strides = [1, 1]} : vector<2x128xf32> to vector<2x32xf32>
    %cst_12 = arith.constant 5.000000e-01 : f32
    %22 = vector.broadcast %cst_12 : f32 to vector<2x32xf32>
    %23 = arith.mulf %22, %21 : vector<2x32xf32>
    %cst_13 = arith.constant 5.000000e-01 : f32
    %24 = vector.broadcast %cst_13 : f32 to vector<2x32xf32>
    %25 = arith.addf %23, %24 : vector<2x32xf32>
    %26 = vector.extract_strided_slice %15 {offsets = [0, 64], sizes = [2, 32], strides = [1, 1]} : vector<2x128xf32> to vector<2x32xf32>
    %27 = vector.extract_strided_slice %15 {offsets = [0, 96], sizes = [2, 32], strides = [1, 1]} : vector<2x128xf32> to vector<2x32xf32>
    %cst_14 = arith.constant 5.000000e-01 : f32
    %28 = vector.broadcast %cst_14 : f32 to vector<2x32xf32>
    %29 = arith.mulf %28, %27 : vector<2x32xf32>
    %cst_15 = arith.constant 5.000000e-01 : f32
    %30 = vector.broadcast %cst_15 : f32 to vector<2x32xf32>
    %31 = arith.addf %29, %30 : vector<2x32xf32>
    %32 = arith.mulf %25, %9 : vector<2x32xf32>
    %33 = arith.mulf %20, %26 : vector<2x32xf32>
    %34 = arith.addf %32, %33 : vector<2x32xf32>
    %35 = math.tanh %34 : vector<2x32xf32>
    %36 = arith.mulf %31, %35 : vector<2x32xf32>
    %37 = vector.extract_strided_slice %6 {offsets = [0, 1, 0], sizes = [2, 1, 128], strides = [1, 1, 1]} : vector<2x8x128xf32> to vector<2x1x128xf32>
    %38 = vector.shape_cast %37 : vector<2x1x128xf32> to vector<2x128xf32>
    %39 = arith.truncf %36 : vector<2x32xf32> to vector<2x32xbf16>
    %cst_16 = arith.constant dense<0.000000e+00> : vector<2x128xf32>
    %40 = tpu.matmul %39, %7, %cst_16 {dimension_numbers = #tpu.dot_dimension_numbers<[1], [0], [0], [1], [0, 0, 1, 1], [], []>} : vector<2x32xbf16>, vector<32x128xbf16>, vector<2x128xf32> -> vector<2x128xf32>
    %41 = arith.addf %38, %40 : vector<2x128xf32>
    %42 = math.tanh %41 : vector<2x128xf32>
    %43 = vector.extract_strided_slice %42 {offsets = [0, 0], sizes = [2, 32], strides = [1, 1]} : vector<2x128xf32> to vector<2x32xf32>
    %cst_17 = arith.constant 5.000000e-01 : f32
    %44 = vector.broadcast %cst_17 : f32 to vector<2x32xf32>
    %45 = arith.mulf %44, %43 : vector<2x32xf32>
    %cst_18 = arith.constant 5.000000e-01 : f32
    %46 = vector.broadcast %cst_18 : f32 to vector<2x32xf32>
    %47 = arith.addf %45, %46 : vector<2x32xf32>
    %48 = vector.extract_strided_slice %42 {offsets = [0, 32], sizes = [2, 32], strides = [1, 1]} : vector<2x128xf32> to vector<2x32xf32>
    %cst_19 = arith.constant 5.000000e-01 : f32
    %49 = vector.broadcast %cst_19 : f32 to vector<2x32xf32>
    %50 = arith.mulf %49, %48 : vector<2x32xf32>
    %cst_20 = arith.constant 5.000000e-01 : f32
    %51 = vector.broadcast %cst_20 : f32 to vector<2x32xf32>
    %52 = arith.addf %50, %51 : vector<2x32xf32>
    %53 = vector.extract_strided_slice %42 {offsets = [0, 64], sizes = [2, 32], strides = [1, 1]} : vector<2x128xf32> to vector<2x32xf32>
    %54 = vector.extract_strided_slice %42 {offsets = [0, 96], sizes = [2, 32], strides = [1, 1]} : vector<2x128xf32> to vector<2x32xf32>
    %cst_21 = arith.constant 5.000000e-01 : f32
    %55 = vector.broadcast %cst_21 : f32 to vector<2x32xf32>
    %56 = arith.mulf %55, %54 : vector<2x32xf32>
    %cst_22 = arith.constant 5.000000e-01 : f32
    %57 = vector.broadcast %cst_22 : f32 to vector<2x32xf32>
    %58 = arith.addf %56, %57 : vector<2x32xf32>
    %59 = arith.mulf %52, %34 : vector<2x32xf32>
    %60 = arith.mulf %47, %53 : vector<2x32xf32>
    %61 = arith.addf %59, %60 : vector<2x32xf32>
    %62 = math.tanh %61 : vector<2x32xf32>
    %63 = arith.mulf %58, %62 : vector<2x32xf32>
    %64 = vector.extract_strided_slice %6 {offsets = [0, 2, 0], sizes = [2, 1, 128], strides = [1, 1, 1]} : vector<2x8x128xf32> to vector<2x1x128xf32>
    %65 = vector.shape_cast %64 : vector<2x1x128xf32> to vector<2x128xf32>
    %66 = arith.truncf %63 : vector<2x32xf32> to vector<2x32xbf16>
    %cst_23 = arith.constant dense<0.000000e+00> : vector<2x128xf32>
    %67 = tpu.matmul %66, %7, %cst_23 {dimension_numbers = #tpu.dot_dimension_numbers<[1], [0], [0], [1], [0, 0, 1, 1], [], []>} : vector<2x32xbf16>, vector<32x128xbf16>, vector<2x128xf32> -> vector<2x128xf32>
    %68 = arith.addf %65, %67 : vector<2x128xf32>
    %69 = math.tanh %68 : vector<2x128xf32>
    %70 = vector.extract_strided_slice %69 {offsets = [0, 0], sizes = [2, 32], strides = [1, 1]} : vector<2x128xf32> to vector<2x32xf32>
    %cst_24 = arith.constant 5.000000e-01 : f32
    %71 = vector.broadcast %cst_24 : f32 to vector<2x32xf32>
    %72 = arith.mulf %71, %70 : vector<2x32xf32>
    %cst_25 = arith.constant 5.000000e-01 : f32
    %73 = vector.broadcast %cst_25 : f32 to vector<2x32xf32>
    %74 = arith.addf %72, %73 : vector<2x32xf32>
    %75 = vector.extract_strided_slice %69 {offsets = [0, 32], sizes = [2, 32], strides = [1, 1]} : vector<2x128xf32> to vector<2x32xf32>
    %cst_26 = arith.constant 5.000000e-01 : f32
    %76 = vector.broadcast %cst_26 : f32 to vector<2x32xf32>
    %77 = arith.mulf %76, %75 : vector<2x32xf32>
    %cst_27 = arith.constant 5.000000e-01 : f32
    %78 = vector.broadcast %cst_27 : f32 to vector<2x32xf32>
    %79 = arith.addf %77, %78 : vector<2x32xf32>
    %80 = vector.extract_strided_slice %69 {offsets = [0, 64], sizes = [2, 32], strides = [1, 1]} : vector<2x128xf32> to vector<2x32xf32>
    %81 = vector.extract_strided_slice %69 {offsets = [0, 96], sizes = [2, 32], strides = [1, 1]} : vector<2x128xf32> to vector<2x32xf32>
    %cst_28 = arith.constant 5.000000e-01 : f32
    %82 = vector.broadcast %cst_28 : f32 to vector<2x32xf32>
    %83 = arith.mulf %82, %81 : vector<2x32xf32>
    %cst_29 = arith.constant 5.000000e-01 : f32
    %84 = vector.broadcast %cst_29 : f32 to vector<2x32xf32>
    %85 = arith.addf %83, %84 : vector<2x32xf32>
    %86 = arith.mulf %79, %61 : vector<2x32xf32>
    %87 = arith.mulf %74, %80 : vector<2x32xf32>
    %88 = arith.addf %86, %87 : vector<2x32xf32>
    %89 = math.tanh %88 : vector<2x32xf32>
    %90 = arith.mulf %85, %89 : vector<2x32xf32>
    %91 = vector.extract_strided_slice %6 {offsets = [0, 3, 0], sizes = [2, 1, 128], strides = [1, 1, 1]} : vector<2x8x128xf32> to vector<2x1x128xf32>
    %92 = vector.shape_cast %91 : vector<2x1x128xf32> to vector<2x128xf32>
    %93 = arith.truncf %90 : vector<2x32xf32> to vector<2x32xbf16>
    %cst_30 = arith.constant dense<0.000000e+00> : vector<2x128xf32>
    %94 = tpu.matmul %93, %7, %cst_30 {dimension_numbers = #tpu.dot_dimension_numbers<[1], [0], [0], [1], [0, 0, 1, 1], [], []>} : vector<2x32xbf16>, vector<32x128xbf16>, vector<2x128xf32> -> vector<2x128xf32>
    %95 = arith.addf %92, %94 : vector<2x128xf32>
    %96 = math.tanh %95 : vector<2x128xf32>
    %97 = vector.extract_strided_slice %96 {offsets = [0, 0], sizes = [2, 32], strides = [1, 1]} : vector<2x128xf32> to vector<2x32xf32>
    %cst_31 = arith.constant 5.000000e-01 : f32
    %98 = vector.broadcast %cst_31 : f32 to vector<2x32xf32>
    %99 = arith.mulf %98, %97 : vector<2x32xf32>
    %cst_32 = arith.constant 5.000000e-01 : f32
    %100 = vector.broadcast %cst_32 : f32 to vector<2x32xf32>
    %101 = arith.addf %99, %100 : vector<2x32xf32>
    %102 = vector.extract_strided_slice %96 {offsets = [0, 32], sizes = [2, 32], strides = [1, 1]} : vector<2x128xf32> to vector<2x32xf32>
    %cst_33 = arith.constant 5.000000e-01 : f32
    %103 = vector.broadcast %cst_33 : f32 to vector<2x32xf32>
    %104 = arith.mulf %103, %102 : vector<2x32xf32>
    %cst_34 = arith.constant 5.000000e-01 : f32
    %105 = vector.broadcast %cst_34 : f32 to vector<2x32xf32>
    %106 = arith.addf %104, %105 : vector<2x32xf32>
    %107 = vector.extract_strided_slice %96 {offsets = [0, 64], sizes = [2, 32], strides = [1, 1]} : vector<2x128xf32> to vector<2x32xf32>
    %108 = vector.extract_strided_slice %96 {offsets = [0, 96], sizes = [2, 32], strides = [1, 1]} : vector<2x128xf32> to vector<2x32xf32>
    %cst_35 = arith.constant 5.000000e-01 : f32
    %109 = vector.broadcast %cst_35 : f32 to vector<2x32xf32>
    %110 = arith.mulf %109, %108 : vector<2x32xf32>
    %cst_36 = arith.constant 5.000000e-01 : f32
    %111 = vector.broadcast %cst_36 : f32 to vector<2x32xf32>
    %112 = arith.addf %110, %111 : vector<2x32xf32>
    %113 = arith.mulf %106, %88 : vector<2x32xf32>
    %114 = arith.mulf %101, %107 : vector<2x32xf32>
    %115 = arith.addf %113, %114 : vector<2x32xf32>
    %116 = math.tanh %115 : vector<2x32xf32>
    %117 = arith.mulf %112, %116 : vector<2x32xf32>
    %118 = vector.extract_strided_slice %6 {offsets = [0, 4, 0], sizes = [2, 1, 128], strides = [1, 1, 1]} : vector<2x8x128xf32> to vector<2x1x128xf32>
    %119 = vector.shape_cast %118 : vector<2x1x128xf32> to vector<2x128xf32>
    %120 = arith.truncf %117 : vector<2x32xf32> to vector<2x32xbf16>
    %cst_37 = arith.constant dense<0.000000e+00> : vector<2x128xf32>
    %121 = tpu.matmul %120, %7, %cst_37 {dimension_numbers = #tpu.dot_dimension_numbers<[1], [0], [0], [1], [0, 0, 1, 1], [], []>} : vector<2x32xbf16>, vector<32x128xbf16>, vector<2x128xf32> -> vector<2x128xf32>
    %122 = arith.addf %119, %121 : vector<2x128xf32>
    %123 = math.tanh %122 : vector<2x128xf32>
    %124 = vector.extract_strided_slice %123 {offsets = [0, 0], sizes = [2, 32], strides = [1, 1]} : vector<2x128xf32> to vector<2x32xf32>
    %cst_38 = arith.constant 5.000000e-01 : f32
    %125 = vector.broadcast %cst_38 : f32 to vector<2x32xf32>
    %126 = arith.mulf %125, %124 : vector<2x32xf32>
    %cst_39 = arith.constant 5.000000e-01 : f32
    %127 = vector.broadcast %cst_39 : f32 to vector<2x32xf32>
    %128 = arith.addf %126, %127 : vector<2x32xf32>
    %129 = vector.extract_strided_slice %123 {offsets = [0, 32], sizes = [2, 32], strides = [1, 1]} : vector<2x128xf32> to vector<2x32xf32>
    %cst_40 = arith.constant 5.000000e-01 : f32
    %130 = vector.broadcast %cst_40 : f32 to vector<2x32xf32>
    %131 = arith.mulf %130, %129 : vector<2x32xf32>
    %cst_41 = arith.constant 5.000000e-01 : f32
    %132 = vector.broadcast %cst_41 : f32 to vector<2x32xf32>
    %133 = arith.addf %131, %132 : vector<2x32xf32>
    %134 = vector.extract_strided_slice %123 {offsets = [0, 64], sizes = [2, 32], strides = [1, 1]} : vector<2x128xf32> to vector<2x32xf32>
    %135 = vector.extract_strided_slice %123 {offsets = [0, 96], sizes = [2, 32], strides = [1, 1]} : vector<2x128xf32> to vector<2x32xf32>
    %cst_42 = arith.constant 5.000000e-01 : f32
    %136 = vector.broadcast %cst_42 : f32 to vector<2x32xf32>
    %137 = arith.mulf %136, %135 : vector<2x32xf32>
    %cst_43 = arith.constant 5.000000e-01 : f32
    %138 = vector.broadcast %cst_43 : f32 to vector<2x32xf32>
    %139 = arith.addf %137, %138 : vector<2x32xf32>
    %140 = arith.mulf %133, %115 : vector<2x32xf32>
    %141 = arith.mulf %128, %134 : vector<2x32xf32>
    %142 = arith.addf %140, %141 : vector<2x32xf32>
    %143 = math.tanh %142 : vector<2x32xf32>
    %144 = arith.mulf %139, %143 : vector<2x32xf32>
    %145 = vector.extract_strided_slice %6 {offsets = [0, 5, 0], sizes = [2, 1, 128], strides = [1, 1, 1]} : vector<2x8x128xf32> to vector<2x1x128xf32>
    %146 = vector.shape_cast %145 : vector<2x1x128xf32> to vector<2x128xf32>
    %147 = arith.truncf %144 : vector<2x32xf32> to vector<2x32xbf16>
    %cst_44 = arith.constant dense<0.000000e+00> : vector<2x128xf32>
    %148 = tpu.matmul %147, %7, %cst_44 {dimension_numbers = #tpu.dot_dimension_numbers<[1], [0], [0], [1], [0, 0, 1, 1], [], []>} : vector<2x32xbf16>, vector<32x128xbf16>, vector<2x128xf32> -> vector<2x128xf32>
    %149 = arith.addf %146, %148 : vector<2x128xf32>
    %150 = math.tanh %149 : vector<2x128xf32>
    %151 = vector.extract_strided_slice %150 {offsets = [0, 0], sizes = [2, 32], strides = [1, 1]} : vector<2x128xf32> to vector<2x32xf32>
    %cst_45 = arith.constant 5.000000e-01 : f32
    %152 = vector.broadcast %cst_45 : f32 to vector<2x32xf32>
    %153 = arith.mulf %152, %151 : vector<2x32xf32>
    %cst_46 = arith.constant 5.000000e-01 : f32
    %154 = vector.broadcast %cst_46 : f32 to vector<2x32xf32>
    %155 = arith.addf %153, %154 : vector<2x32xf32>
    %156 = vector.extract_strided_slice %150 {offsets = [0, 32], sizes = [2, 32], strides = [1, 1]} : vector<2x128xf32> to vector<2x32xf32>
    %cst_47 = arith.constant 5.000000e-01 : f32
    %157 = vector.broadcast %cst_47 : f32 to vector<2x32xf32>
    %158 = arith.mulf %157, %156 : vector<2x32xf32>
    %cst_48 = arith.constant 5.000000e-01 : f32
    %159 = vector.broadcast %cst_48 : f32 to vector<2x32xf32>
    %160 = arith.addf %158, %159 : vector<2x32xf32>
    %161 = vector.extract_strided_slice %150 {offsets = [0, 64], sizes = [2, 32], strides = [1, 1]} : vector<2x128xf32> to vector<2x32xf32>
    %162 = vector.extract_strided_slice %150 {offsets = [0, 96], sizes = [2, 32], strides = [1, 1]} : vector<2x128xf32> to vector<2x32xf32>
    %cst_49 = arith.constant 5.000000e-01 : f32
    %163 = vector.broadcast %cst_49 : f32 to vector<2x32xf32>
    %164 = arith.mulf %163, %162 : vector<2x32xf32>
    %cst_50 = arith.constant 5.000000e-01 : f32
    %165 = vector.broadcast %cst_50 : f32 to vector<2x32xf32>
    %166 = arith.addf %164, %165 : vector<2x32xf32>
    %167 = arith.mulf %160, %142 : vector<2x32xf32>
    %168 = arith.mulf %155, %161 : vector<2x32xf32>
    %169 = arith.addf %167, %168 : vector<2x32xf32>
    %170 = math.tanh %169 : vector<2x32xf32>
    %171 = arith.mulf %166, %170 : vector<2x32xf32>
    %172 = vector.extract_strided_slice %6 {offsets = [0, 6, 0], sizes = [2, 1, 128], strides = [1, 1, 1]} : vector<2x8x128xf32> to vector<2x1x128xf32>
    %173 = vector.shape_cast %172 : vector<2x1x128xf32> to vector<2x128xf32>
    %174 = arith.truncf %171 : vector<2x32xf32> to vector<2x32xbf16>
    %cst_51 = arith.constant dense<0.000000e+00> : vector<2x128xf32>
    %175 = tpu.matmul %174, %7, %cst_51 {dimension_numbers = #tpu.dot_dimension_numbers<[1], [0], [0], [1], [0, 0, 1, 1], [], []>} : vector<2x32xbf16>, vector<32x128xbf16>, vector<2x128xf32> -> vector<2x128xf32>
    %176 = arith.addf %173, %175 : vector<2x128xf32>
    %177 = math.tanh %176 : vector<2x128xf32>
    %178 = vector.extract_strided_slice %177 {offsets = [0, 0], sizes = [2, 32], strides = [1, 1]} : vector<2x128xf32> to vector<2x32xf32>
    %cst_52 = arith.constant 5.000000e-01 : f32
    %179 = vector.broadcast %cst_52 : f32 to vector<2x32xf32>
    %180 = arith.mulf %179, %178 : vector<2x32xf32>
    %cst_53 = arith.constant 5.000000e-01 : f32
    %181 = vector.broadcast %cst_53 : f32 to vector<2x32xf32>
    %182 = arith.addf %180, %181 : vector<2x32xf32>
    %183 = vector.extract_strided_slice %177 {offsets = [0, 32], sizes = [2, 32], strides = [1, 1]} : vector<2x128xf32> to vector<2x32xf32>
    %cst_54 = arith.constant 5.000000e-01 : f32
    %184 = vector.broadcast %cst_54 : f32 to vector<2x32xf32>
    %185 = arith.mulf %184, %183 : vector<2x32xf32>
    %cst_55 = arith.constant 5.000000e-01 : f32
    %186 = vector.broadcast %cst_55 : f32 to vector<2x32xf32>
    %187 = arith.addf %185, %186 : vector<2x32xf32>
    %188 = vector.extract_strided_slice %177 {offsets = [0, 64], sizes = [2, 32], strides = [1, 1]} : vector<2x128xf32> to vector<2x32xf32>
    %189 = vector.extract_strided_slice %177 {offsets = [0, 96], sizes = [2, 32], strides = [1, 1]} : vector<2x128xf32> to vector<2x32xf32>
    %cst_56 = arith.constant 5.000000e-01 : f32
    %190 = vector.broadcast %cst_56 : f32 to vector<2x32xf32>
    %191 = arith.mulf %190, %189 : vector<2x32xf32>
    %cst_57 = arith.constant 5.000000e-01 : f32
    %192 = vector.broadcast %cst_57 : f32 to vector<2x32xf32>
    %193 = arith.addf %191, %192 : vector<2x32xf32>
    %194 = arith.mulf %187, %169 : vector<2x32xf32>
    %195 = arith.mulf %182, %188 : vector<2x32xf32>
    %196 = arith.addf %194, %195 : vector<2x32xf32>
    %197 = math.tanh %196 : vector<2x32xf32>
    %198 = arith.mulf %193, %197 : vector<2x32xf32>
    %199 = vector.extract_strided_slice %6 {offsets = [0, 7, 0], sizes = [2, 1, 128], strides = [1, 1, 1]} : vector<2x8x128xf32> to vector<2x1x128xf32>
    %200 = vector.shape_cast %199 : vector<2x1x128xf32> to vector<2x128xf32>
    %201 = arith.truncf %198 : vector<2x32xf32> to vector<2x32xbf16>
    %cst_58 = arith.constant dense<0.000000e+00> : vector<2x128xf32>
    %202 = tpu.matmul %201, %7, %cst_58 {dimension_numbers = #tpu.dot_dimension_numbers<[1], [0], [0], [1], [0, 0, 1, 1], [], []>} : vector<2x32xbf16>, vector<32x128xbf16>, vector<2x128xf32> -> vector<2x128xf32>
    %203 = arith.addf %200, %202 : vector<2x128xf32>
    %204 = math.tanh %203 : vector<2x128xf32>
    %205 = vector.extract_strided_slice %204 {offsets = [0, 0], sizes = [2, 32], strides = [1, 1]} : vector<2x128xf32> to vector<2x32xf32>
    %cst_59 = arith.constant 5.000000e-01 : f32
    %206 = vector.broadcast %cst_59 : f32 to vector<2x32xf32>
    %207 = arith.mulf %206, %205 : vector<2x32xf32>
    %cst_60 = arith.constant 5.000000e-01 : f32
    %208 = vector.broadcast %cst_60 : f32 to vector<2x32xf32>
    %209 = arith.addf %207, %208 : vector<2x32xf32>
    %210 = vector.extract_strided_slice %204 {offsets = [0, 32], sizes = [2, 32], strides = [1, 1]} : vector<2x128xf32> to vector<2x32xf32>
    %cst_61 = arith.constant 5.000000e-01 : f32
    %211 = vector.broadcast %cst_61 : f32 to vector<2x32xf32>
    %212 = arith.mulf %211, %210 : vector<2x32xf32>
    %cst_62 = arith.constant 5.000000e-01 : f32
    %213 = vector.broadcast %cst_62 : f32 to vector<2x32xf32>
    %214 = arith.addf %212, %213 : vector<2x32xf32>
    %215 = vector.extract_strided_slice %204 {offsets = [0, 64], sizes = [2, 32], strides = [1, 1]} : vector<2x128xf32> to vector<2x32xf32>
    %216 = vector.extract_strided_slice %204 {offsets = [0, 96], sizes = [2, 32], strides = [1, 1]} : vector<2x128xf32> to vector<2x32xf32>
    %cst_63 = arith.constant 5.000000e-01 : f32
    %217 = vector.broadcast %cst_63 : f32 to vector<2x32xf32>
    %218 = arith.mulf %217, %216 : vector<2x32xf32>
    %cst_64 = arith.constant 5.000000e-01 : f32
    %219 = vector.broadcast %cst_64 : f32 to vector<2x32xf32>
    %220 = arith.addf %218, %219 : vector<2x32xf32>
    %221 = arith.mulf %214, %196 : vector<2x32xf32>
    %222 = arith.mulf %209, %215 : vector<2x32xf32>
    %223 = arith.addf %221, %222 : vector<2x32xf32>
    %224 = math.tanh %223 : vector<2x32xf32>
    %225 = arith.mulf %220, %224 : vector<2x32xf32>
    %226 = tpu.concatenate %36, %63, %90, %117, %144, %171, %198, %225 in 1 : vector<2x32xf32>, vector<2x32xf32>, vector<2x32xf32>, vector<2x32xf32>, vector<2x32xf32>, vector<2x32xf32>, vector<2x32xf32>, vector<2x32xf32> -> vector<2x256xf32>
    %c0_65 = arith.constant 0 : index
    %c0_66 = arith.constant 0 : index
    %227 = vector.load %arg4[%c0_65, %c0_66] : memref<2x256xf32, #tpu.memory_space<vmem>>, vector<2x256xf32>
    tpu.vector_store %arg4[%c0_65, %c0_66], %226 {strides = array<i32>} : memref<2x256xf32, #tpu.memory_space<vmem>>, vector<2x256xf32>,
    return
  }
}

</mosaic_0001>

<llo_original>
// kernel: lstm_forward.1
$region0: #{lstm_forward.1}
  #allocation0 [shape = 'u32[]', space=smem, size = 0x4, offset = 0x4, fixed_abs, tag = 'smem constant byte address 0x4 - core index']
  #allocation1 [shape = 'u32[144,128]{1,0:T(1,128)}', space=vmem, size = 0x12000, scoped, tag = 'internal scratch']
  %s0 = inlined_call_operand.vmem [shape: f32[16,10], index: 0, kind: input, shape index: {}]
  %s1 = inlined_call_operand.vmem [shape: f32[10,128], index: 1, kind: input, shape index: {}]
  %s2 = inlined_call_operand.vmem [shape: bf16[32,128], index: 2, kind: input, shape index: {}]
  %s3 = inlined_call_operand.vmem [shape: f32[1,128], index: 3, kind: input, shape index: {}]
  %s4 = inlined_call_operand.vmem [shape: f32[2,256], index: 4, kind: output, shape index: {}]
  %s5 = sld [smem:[#allocation0]]
  $region26: #{lstm_forward.1} parent=0
    _
  %s7 = ssub.s32 1, %s5
  %s8 = scalar_select 0, %s7, %s5
  // Predicated region
  $region2: #{lstm_forward.1} parent=0 // pred_check
    _
  $region3: #{lstm_forward.1} parent=0 // pred_check_branch
    %10 = sbr.rel (0) target = $region5
  $region4: #{lstm_forward.1} parent=0 // pred_region
    _
  $region5: #{lstm_forward.1} parent=0 // pred_fallthru
    _
  // Predicated region
  $region6: #{lstm_forward.1} parent=0 // pred_check
    _
  $region7: #{lstm_forward.1} parent=0 // pred_check_branch
    %12 = sbr.rel (0) target = $region9
  $region8: #{lstm_forward.1} parent=0 // pred_region
    _
  $region9: #{lstm_forward.1} parent=0 // pred_fallthru
    _
  // Predicated region
  $region10: #{lstm_forward.1} parent=0 // pred_check
    _
  $region11: #{lstm_forward.1} parent=0 // pred_check_branch
    %14 = sbr.rel (0) target = $region13
  $region12: #{lstm_forward.1} parent=0 // pred_region
    _
  $region13: #{lstm_forward.1} parent=0 // pred_fallthru
    _
  // Predicated region
  $region14: #{lstm_forward.1} parent=0 // pred_check
    _
  $region15: #{lstm_forward.1} parent=0 // pred_check_branch
    %16 = sbr.rel (0) target = $region17
  $region16: #{lstm_forward.1} parent=0 // pred_region
    _
  $region17: #{lstm_forward.1} parent=0 // pred_fallthru
    _
  %v18 = vld [vmem:[%s0] sm:$0xff]
  %v19 = vld [vmem:[%s0 + $0x8] sm:$0xff]
  %v20 = vld [vmem:[%s1] sm:$0xff]
  %v21 = vld [vmem:[%s1 + $0x8] sm:$0x3]
  %v22 = vld [vmem:[%s3] sm:$0x1]
  %v24 = vlaneseq
  %v25 = vshrl.u32 %v24, 7
  %v26 = vsub.s32 0, %v25
  %v27 = vrot.slane %v22, %v26
  %vm29 = vcmask 80896
  %v31 = vsel %vm29, %v18, 0
  %v34 = vsel %vm29, %v19, 0
  %vm36 = vcmask 1041408
  %v38 = vsel %vm36, %v21, 0
  %40 = vmatprep.subr.mxu0 0.0
  %41 = vmatpush1.msra.mxu0 %v20
  %42 = vmatprep.subr.mxu0 0.0
  %43 = vmatpush1.msra.mxu0 %v38
  %44 = vmatprep.subr.mxu0 0.0
  %45 = vmatpush1.msra.mxu0 0.0
  %46 = vmatprep.subr.mxu0 0.0
  %47 = vmatpush1.msra.mxu0 0.0
  %48 = vmatprep.subr.mxu0 0.0
  %49 = vmatpush1.msra.mxu0 0.0
  %50 = vmatprep.subr.mxu0 0.0
  %51 = vmatpush1.msra.mxu0 0.0
  %52 = vmatprep.subr.mxu0 0.0
  %53 = vmatpush1.msra.mxu0 0.0
  %54 = vmatprep.subr.mxu0 0.0
  %55 = vmatpush1.msra.mxu0 0.0
  %56 = vmatprep.subr.mxu0 0.0
  %57 = vmatpush1.msra.mxu0 0.0
  %58 = vmatprep.subr.mxu0 0.0
  %59 = vmatpush1.msra.mxu0 0.0
  %60 = vmatprep.subr.mxu0 0.0
  %61 = vmatpush1.msra.mxu0 0.0
  %62 = vmatprep.subr.mxu0 0.0
  %63 = vmatpush1.msra.mxu0 0.0
  %64 = vmatprep.subr.mxu0 0.0
  %65 = vmatpush1.msra.mxu0 0.0
  %66 = vmatprep.subr.mxu0 0.0
  %67 = vmatpush1.msra.mxu0 0.0
  %68 = vmatprep.subr.mxu0 0.0
  %69 = vmatpush1.msra.mxu0 0.0
  %70 = vmatprep.subr.mxu0 0.0
  %71 = vmatpush1.msra.mxu0 0.0
  %72 = vmatprep.subr.mxu0 0.0
  %73 = vmatpush1.msra.mxu0 0.0
  %74 = vmatprep.subr.mxu0 0.0
  %75 = vmatpush1.msra.mxu0 0.0
  %76 = vmatprep.subr.mxu0 0.0
  %77 = vmatpush1.msra.mxu0 0.0
  %78 = vmatprep.subr.mxu0 0.0
  %79 = vmatpush1.msra.mxu0 0.0
  %80 = vmatprep.subr.mxu0 0.0
  %81 = vmatpush1.msra.mxu0 0.0
  %82 = vmatprep.subr.mxu0 0.0
  %83 = vmatpush1.msra.mxu0 0.0
  %84 = vmatprep.subr.mxu0 0.0
  %85 = vmatpush1.msra.mxu0 0.0
  %86 = vmatprep.subr.mxu0 0.0
  %87 = vmatpush1.msra.mxu0 0.0
  %88 = vmatprep.subr.mxu0 0.0
  %89 = vmatpush1.msra.mxu0 0.0
  %90 = vmatprep.subr.mxu0 0.0
  %91 = vmatpush1.msra.mxu0 0.0
  %92 = vmatprep.subr.mxu0 0.0
  %93 = vmatpush1.msra.mxu0 0.0
  %94 = vmatprep.subr.mxu0 0.0
  %95 = vmatpush1.msra.mxu0 0.0
  %96 = vmatprep.subr.mxu0 0.0
  %97 = vmatpush1.msra.mxu0 0.0
  %98 = vmatprep.subr.mxu0 0.0
  %99 = vmatpush1.msra.mxu0 0.0
  %100 = vmatprep.subr.mxu0 0.0
  %101 = vmatpush1.msra.mxu0 0.0
  %102 = vmatprep.subr.mxu0 0.0
  %103 = vmatpush1.msra.mxu0 0.0
  %104 = vmatprep.mubr.f32.mxu0 0.0
  %105 = vmatmul.mubr.f32.gmra.mrb[0].mxu0 %v31
  %v106 = vpop.f32.mrb[0].mxu0
  %v107 = vadd.f32 %v27, %v106
  %v108 = vpop.f32.mrb[0].mxu0
  %109 = vmatprep.mubr.f32.mxu0 0.0
  %110 = vmatmul.mubr.f32.gmra.mrb[0].mxu0 %v34
  %v111 = vpop.f32.mrb[0].mxu0
  %v112 = vadd.f32 %v27, %v111
  %v113 = vpop.f32.mrb[0].mxu0
  %114 = vdwg.mxu0
  %v115 = vld [vmem:[%s2] sm:$0xf]
  %v116 = vld [vmem:[%s2 + $0x4] sm:$0xf]
  %v117 = vld [vmem:[%s2 + $0x8] sm:$0xf]
  %v118 = vld [vmem:[%s2 + $0xc] sm:$0xf]
  %v123 = vunpack.c.l.b16 %v115
  %v124 = vunpack.c.l.b16 %v116
  %v125 = vunpack.c.l.b16 %v117
  %v126 = vunpack.c.l.b16 %v118
  %v127 = vpack.c.b16 %v124, %v123
  %v128 = vpack.c.b16 %v126, %v125
  %vm131 = vcmask 261120
  %v133 = vsel %vm131, 0, 0
  %135 = vmatprep.subr.bf16.mxu0 0
  %136 = vmatpush1.bf16.msra.mxu0 %v127
  %137 = vmatprep.subr.bf16.mxu0 0
  %138 = vmatpush1.bf16.msra.mxu0 %v128
  %139 = vmatprep.subr.bf16.mxu0 0
  %140 = vmatpush1.bf16.msra.mxu0 0
  %141 = vmatprep.subr.bf16.mxu0 0
  %142 = vmatpush1.bf16.msra.mxu0 0
  %143 = vmatprep.subr.bf16.mxu0 0
  %144 = vmatpush1.bf16.msra.mxu0 0
  %145 = vmatprep.subr.bf16.mxu0 0
  %146 = vmatpush1.bf16.msra.mxu0 0
  %147 = vmatprep.subr.bf16.mxu0 0
  %148 = vmatpush1.bf16.msra.mxu0 0
  %149 = vmatprep.subr.bf16.mxu0 0
  %150 = vmatpush1.bf16.msra.mxu0 0
  %151 = vmatprep.subr.bf16.mxu0 0
  %152 = vmatpush1.bf16.msra.mxu0 0
  %153 = vmatprep.subr.bf16.mxu0 0
  %154 = vmatpush1.bf16.msra.mxu0 0
  %155 = vmatprep.subr.bf16.mxu0 0
  %156 = vmatpush1.bf16.msra.mxu0 0
  %157 = vmatprep.subr.bf16.mxu0 0
  %158 = vmatpush1.bf16.msra.mxu0 0
  %159 = vmatprep.subr.bf16.mxu0 0
  %160 = vmatpush1.bf16.msra.mxu0 0
  %161 = vmatprep.subr.bf16.mxu0 0
  %162 = vmatpush1.bf16.msra.mxu0 0
  %163 = vmatprep.subr.bf16.mxu0 0
  %164 = vmatpush1.bf16.msra.mxu0 0
  %165 = vmatprep.subr.bf16.mxu0 0
  %166 = vmatpush1.bf16.msra.mxu0 0
  %167 = vmatprep.mubr.bf16.mxu0 0
  %168 = vmatmul.mubr.bf16.gmra.mrb[0].mxu0 %v133
  %v169 = vpop.f32.mrb[0].mxu0
  %v170 = vadd.f32 0.0, %v169
  %v171 = vpop.f32.mrb[0].mxu0
  %v172 = vpop.f32.mrb[0].mxu0
  %v173 = vpop.f32.mrb[0].mxu0
  %174 = vdwg.mxu0
  %v176 = vrot.slane %v170, 1
  %v179 = vadd.f32 %v107, %v170
  %v180 = vadd.f32 %v112, %v176
  %v181 = vtanh.pop %v179
  %v182 = vtanh.pop %v180
  %v183 = vmul.f32 %v181, 0.5
  %v184 = vmul.f32 %v182, 0.5
  %v185 = vadd.f32 %v183, 0.5
  %v186 = vadd.f32 %v184, 0.5
  %v187 = vmul.f32 %v185, 0.0
  %v188 = vmul.f32 %v186, 0.0
  %191 = vrot.lane.b32.xlu0 %v181, 64
  %v192 = vpop.permute.xlu0 %191
  %193 = vrot.lane.b32.xlu0 %v182, 64
  %v194 = vpop.permute.xlu0 %193
  %v197 = vmul.f32 %v185, %v192
  %v198 = vmul.f32 %v186, %v194
  %201 = vrot.lane.b32.xlu0 %v197, 32
  %v202 = vpop.permute.xlu0 %201
  %203 = vrot.lane.b32.xlu0 %v198, 32
  %v204 = vpop.permute.xlu0 %203
  %v207 = vadd.f32 %v187, %v202
  %v208 = vadd.f32 %v188, %v204
  %v209 = vtanh.pop %v207
  %v210 = vtanh.pop %v208
  %213 = vrot.lane.b32.xlu0 %v209, 64
  %v214 = vpop.permute.xlu0 %213
  %215 = vrot.lane.b32.xlu0 %v210, 64
  %v216 = vpop.permute.xlu0 %215
  %v219 = vmul.f32 %v185, %v214
  %v220 = vmul.f32 %v186, %v216
  %v221 = vpack.c.bf16 %v219, %v219
  %v222 = vpack.c.bf16 %v220, %v220
  %v225 = vunpack.c.l.b16 %v221
  %v226 = vunpack.c.l.b16 %v222
  %v227 = vrot.slane %v226, 7
  %vm228 = vcmask 1041409
  %v229 = vsel %vm228, %v227, %v225
  %v230 = vpack.c.b16 %v229, %v229
  %231 = vrot.lane.b32.xlu0 %v230, 32
  %v232 = vpop.permute.xlu0 %231
  %v234 = vsel %vm131, %v232, 0
  %236 = vmatprep.subr.bf16.mxu0 0
  %237 = vmatpush1.bf16.msra.mxu0 %v127
  %238 = vmatprep.subr.bf16.mxu0 0
  %239 = vmatpush1.bf16.msra.mxu0 %v128
  %240 = vmatprep.subr.bf16.mxu0 0
  %241 = vmatpush1.bf16.msra.mxu0 0
  %242 = vmatprep.subr.bf16.mxu0 0
  %243 = vmatpush1.bf16.msra.mxu0 0
  %244 = vmatprep.subr.bf16.mxu0 0
  %245 = vmatpush1.bf16.msra.mxu0 0
  %246 = vmatprep.subr.bf16.mxu0 0
  %247 = vmatpush1.bf16.msra.mxu0 0
  %248 = vmatprep.subr.bf16.mxu0 0
  %249 = vmatpush1.bf16.msra.mxu0 0
  %250 = vmatprep.subr.bf16.mxu0 0
  %251 = vmatpush1.bf16.msra.mxu0 0
  %252 = vmatprep.subr.bf16.mxu0 0
  %253 = vmatpush1.bf16.msra.mxu0 0
  %254 = vmatprep.subr.bf16.mxu0 0
  %255 = vmatpush1.bf16.msra.mxu0 0
  %256 = vmatprep.subr.bf16.mxu0 0
  %257 = vmatpush1.bf16.msra.mxu0 0
  %258 = vmatprep.subr.bf16.mxu0 0
  %259 = vmatpush1.bf16.msra.mxu0 0
  %260 = vmatprep.subr.bf16.mxu0 0
  %261 = vmatpush1.bf16.msra.mxu0 0
  %262 = vmatprep.subr.bf16.mxu0 0
  %263 = vmatpush1.bf16.msra.mxu0 0
  %264 = vmatprep.subr.bf16.mxu0 0
  %265 = vmatpush1.bf16.msra.mxu0 0
  %266 = vmatprep.subr.bf16.mxu0 0
  %267 = vmatpush1.bf16.msra.mxu0 0
  %268 = vmatprep.mubr.bf16.mxu0 0
  %269 = vmatmul.mubr.bf16.gmra.mrb[0].mxu0 %v234
  %v270 = vpop.f32.mrb[0].mxu0
  %v271 = vadd.f32 0.0, %v270
  %v272 = vpop.f32.mrb[0].mxu0
  %v273 = vpop.f32.mrb[0].mxu0
  %v274 = vpop.f32.mrb[0].mxu0
  %275 = vdwg.mxu0
  %v277 = vrot.slane %v271, 7
  %v280 = vadd.f32 %v107, %v277
  %v281 = vadd.f32 %v112, %v271
  %v282 = vtanh.pop %v280
  %v283 = vtanh.pop %v281
  %v284 = vmul.f32 %v282, 0.5
  %v285 = vmul.f32 %v283, 0.5
  %v286 = vadd.f32 %v284, 0.5
  %v287 = vadd.f32 %v285, 0.5
  %v290 = vrot.slane %v207, 7
  %v291 = vrot.slane %v208, 7
  %v294 = vmul.f32 %v286, %v290
  %v295 = vmul.f32 %v287, %v291
  %298 = vrot.lane.b32.xlu0 %v282, 64
  %v299 = vpop.permute.xlu0 %298
  %300 = vrot.lane.b32.xlu0 %v283, 64
  %v301 = vpop.permute.xlu0 %300
  %v304 = vmul.f32 %v286, %v299
  %v305 = vmul.f32 %v287, %v301
  %308 = vrot.lane.b32.xlu0 %v304, 32
  %v309 = vpop.permute.xlu0 %308
  %310 = vrot.lane.b32.xlu0 %v305, 32
  %v311 = vpop.permute.xlu0 %310
  %v314 = vadd.f32 %v294, %v309
  %v315 = vadd.f32 %v295, %v311
  %v316 = vtanh.pop %v314
  %v317 = vtanh.pop %v315
  %320 = vrot.lane.b32.xlu0 %v316, 64
  %v321 = vpop.permute.xlu0 %320
  %322 = vrot.lane.b32.xlu0 %v317, 64
  %v323 = vpop.permute.xlu0 %322
  %v326 = vmul.f32 %v286, %v321
  %v327 = vmul.f32 %v287, %v323
  %v328 = vpack.c.bf16 %v326, %v326
  %v329 = vpack.c.bf16 %v327, %v327
  %v332 = vunpack.c.l.b16 %v328
  %v333 = vunpack.c.l.b16 %v329
  %v334 = vrot.slane %v332, 1
  %v335 = vsel %vm228, %v333, %v334
  %v336 = vpack.c.b16 %v335, %v335
  %337 = vrot.lane.b32.xlu0 %v336, 32
  %v338 = vpop.permute.xlu0 %337
  %v340 = vsel %vm131, %v338, 0
  %342 = vmatprep.subr.bf16.mxu0 0
  %343 = vmatpush1.bf16.msra.mxu0 %v127
  %344 = vmatprep.subr.bf16.mxu0 0
  %345 = vmatpush1.bf16.msra.mxu0 %v128
  %346 = vmatprep.subr.bf16.mxu0 0
  %347 = vmatpush1.bf16.msra.mxu0 0
  %348 = vmatprep.subr.bf16.mxu0 0
  %349 = vmatpush1.bf16.msra.mxu0 0
  %350 = vmatprep.subr.bf16.mxu0 0
  %351 = vmatpush1.bf16.msra.mxu0 0
  %352 = vmatprep.subr.bf16.mxu0 0
  %353 = vmatpush1.bf16.msra.mxu0 0
  %354 = vmatprep.subr.bf16.mxu0 0
  %355 = vmatpush1.bf16.msra.mxu0 0
  %356 = vmatprep.subr.bf16.mxu0 0
  %357 = vmatpush1.bf16.msra.mxu0 0
  %358 = vmatprep.subr.bf16.mxu0 0
  %359 = vmatpush1.bf16.msra.mxu0 0
  %360 = vmatprep.subr.bf16.mxu0 0
  %361 = vmatpush1.bf16.msra.mxu0 0
  %362 = vmatprep.subr.bf16.mxu0 0
  %363 = vmatpush1.bf16.msra.mxu0 0
  %364 = vmatprep.subr.bf16.mxu0 0
  %365 = vmatpush1.bf16.msra.mxu0 0
  %366 = vmatprep.subr.bf16.mxu0 0
  %367 = vmatpush1.bf16.msra.mxu0 0
  %368 = vmatprep.subr.bf16.mxu0 0
  %369 = vmatpush1.bf16.msra.mxu0 0
  %370 = vmatprep.subr.bf16.mxu0 0
  %371 = vmatpush1.bf16.msra.mxu0 0
  %372 = vmatprep.subr.bf16.mxu0 0
  %373 = vmatpush1.bf16.msra.mxu0 0
  %374 = vmatprep.mubr.bf16.mxu0 0
  %375 = vmatmul.mubr.bf16.gmra.mrb[0].mxu0 %v340
  %v376 = vpop.f32.mrb[0].mxu0
  %v377 = vadd.f32 0.0, %v376
  %v378 = vpop.f32.mrb[0].mxu0
  %v379 = vpop.f32.mrb[0].mxu0
  %v380 = vpop.f32.mrb[0].mxu0
  %381 = vdwg.mxu0
  %v383 = vrot.slane %v377, 6
  %v384 = vrot.slane %v377, 7
  %v387 = vadd.f32 %v107, %v383
  %v388 = vadd.f32 %v112, %v384
  %v389 = vtanh.pop %v387
  %v390 = vtanh.pop %v388
  %v391 = vmul.f32 %v389, 0.5
  %v392 = vmul.f32 %v390, 0.5
  %v393 = vadd.f32 %v391, 0.5
  %v394 = vadd.f32 %v392, 0.5
  %v397 = vrot.slane %v314, 7
  %v398 = vrot.slane %v315, 7
  %v401 = vmul.f32 %v393, %v397
  %v402 = vmul.f32 %v394, %v398
  %405 = vrot.lane.b32.xlu0 %v389, 64
  %v406 = vpop.permute.xlu0 %405
  %407 = vrot.lane.b32.xlu0 %v390, 64
  %v408 = vpop.permute.xlu0 %407
  %v411 = vmul.f32 %v393, %v406
  %v412 = vmul.f32 %v394, %v408
  %415 = vrot.lane.b32.xlu0 %v411, 32
  %v416 = vpop.permute.xlu0 %415
  %417 = vrot.lane.b32.xlu0 %v412, 32
  %v418 = vpop.permute.xlu0 %417
  %v421 = vadd.f32 %v401, %v416
  %v422 = vadd.f32 %v402, %v418
  %v423 = vtanh.pop %v421
  %v424 = vtanh.pop %v422
  %427 = vrot.lane.b32.xlu0 %v423, 64
  %v428 = vpop.permute.xlu0 %427
  %429 = vrot.lane.b32.xlu0 %v424, 64
  %v430 = vpop.permute.xlu0 %429
  %v433 = vmul.f32 %v393, %v428
  %v434 = vmul.f32 %v394, %v430
  %v435 = vpack.c.bf16 %v433, %v433
  %v436 = vpack.c.bf16 %v434, %v434
  %v439 = vunpack.c.l.b16 %v435
  %v440 = vunpack.c.l.b16 %v436
  %v441 = vrot.slane %v439, 2
  %v442 = vrot.slane %v440, 1
  %v443 = vsel %vm228, %v442, %v441
  %v444 = vpack.c.b16 %v443, %v443
  %445 = vrot.lane.b32.xlu0 %v444, 32
  %v446 = vpop.permute.xlu0 %445
  %v448 = vsel %vm131, %v446, 0
  %450 = vmatprep.subr.bf16.mxu0 0
  %451 = vmatpush1.bf16.msra.mxu0 %v127
  %452 = vmatprep.subr.bf16.mxu0 0
  %453 = vmatpush1.bf16.msra.mxu0 %v128
  %454 = vmatprep.subr.bf16.mxu0 0
  %455 = vmatpush1.bf16.msra.mxu0 0
  %456 = vmatprep.subr.bf16.mxu0 0
  %457 = vmatpush1.bf16.msra.mxu0 0
  %458 = vmatprep.subr.bf16.mxu0 0
  %459 = vmatpush1.bf16.msra.mxu0 0
  %460 = vmatprep.subr.bf16.mxu0 0
  %461 = vmatpush1.bf16.msra.mxu0 0
  %462 = vmatprep.subr.bf16.mxu0 0
  %463 = vmatpush1.bf16.msra.mxu0 0
  %464 = vmatprep.subr.bf16.mxu0 0
  %465 = vmatpush1.bf16.msra.mxu0 0
  %466 = vmatprep.subr.bf16.mxu0 0
  %467 = vmatpush1.bf16.msra.mxu0 0
  %468 = vmatprep.subr.bf16.mxu0 0
  %469 = vmatpush1.bf16.msra.mxu0 0
  %470 = vmatprep.subr.bf16.mxu0 0
  %471 = vmatpush1.bf16.msra.mxu0 0
  %472 = vmatprep.subr.bf16.mxu0 0
  %473 = vmatpush1.bf16.msra.mxu0 0
  %474 = vmatprep.subr.bf16.mxu0 0
  %475 = vmatpush1.bf16.msra.mxu0 0
  %476 = vmatprep.subr.bf16.mxu0 0
  %477 = vmatpush1.bf16.msra.mxu0 0
  %478 = vmatprep.subr.bf16.mxu0 0
  %479 = vmatpush1.bf16.msra.mxu0 0
  %480 = vmatprep.subr.bf16.mxu0 0
  %481 = vmatpush1.bf16.msra.mxu0 0
  %482 = vmatprep.mubr.bf16.mxu0 0
  %483 = vmatmul.mubr.bf16.gmra.mrb[0].mxu0 %v448
  %v484 = vpop.f32.mrb[0].mxu0
  %v485 = vadd.f32 0.0, %v484
  %v486 = vpop.f32.mrb[0].mxu0
  %v487 = vpop.f32.mrb[0].mxu0
  %v488 = vpop.f32.mrb[0].mxu0
  %489 = vdwg.mxu0
  %v491 = vrot.slane %v485, 5
  %v492 = vrot.slane %v485, 6
  %v495 = vadd.f32 %v107, %v491
  %v496 = vadd.f32 %v112, %v492
  %v497 = vtanh.pop %v495
  %v498 = vtanh.pop %v496
  %v499 = vmul.f32 %v497, 0.5
  %v500 = vmul.f32 %v498, 0.5
  %v501 = vadd.f32 %v499, 0.5
  %v502 = vadd.f32 %v500, 0.5
  %v505 = vrot.slane %v421, 7
  %v506 = vrot.slane %v422, 7
  %v509 = vmul.f32 %v501, %v505
  %v510 = vmul.f32 %v502, %v506
  %513 = vrot.lane.b32.xlu0 %v497, 64
  %v514 = vpop.permute.xlu0 %513
  %515 = vrot.lane.b32.xlu0 %v498, 64
  %v516 = vpop.permute.xlu0 %515
  %v519 = vmul.f32 %v501, %v514
  %v520 = vmul.f32 %v502, %v516
  %523 = vrot.lane.b32.xlu0 %v519, 32
  %v524 = vpop.permute.xlu0 %523
  %525 = vrot.lane.b32.xlu0 %v520, 32
  %v526 = vpop.permute.xlu0 %525
  %v529 = vadd.f32 %v509, %v524
  %v530 = vadd.f32 %v510, %v526
  %v531 = vtanh.pop %v529
  %v532 = vtanh.pop %v530
  %535 = vrot.lane.b32.xlu0 %v531, 64
  %v536 = vpop.permute.xlu0 %535
  %537 = vrot.lane.b32.xlu0 %v532, 64
  %v538 = vpop.permute.xlu0 %537
  %v541 = vmul.f32 %v501, %v536
  %v542 = vmul.f32 %v502, %v538
  %v543 = vpack.c.bf16 %v541, %v541
  %v544 = vpack.c.bf16 %v542, %v542
  %v547 = vunpack.c.l.b16 %v543
  %v548 = vunpack.c.l.b16 %v544
  %v549 = vrot.slane %v547, 3
  %v550 = vrot.slane %v548, 2
  %v551 = vsel %vm228, %v550, %v549
  %v552 = vpack.c.b16 %v551, %v551
  %553 = vrot.lane.b32.xlu0 %v552, 32
  %v554 = vpop.permute.xlu0 %553
  %v556 = vsel %vm131, %v554, 0
  %558 = vmatprep.subr.bf16.mxu0 0
  %559 = vmatpush1.bf16.msra.mxu0 %v127
  %560 = vmatprep.subr.bf16.mxu0 0
  %561 = vmatpush1.bf16.msra.mxu0 %v128
  %562 = vmatprep.subr.bf16.mxu0 0
  %563 = vmatpush1.bf16.msra.mxu0 0
  %564 = vmatprep.subr.bf16.mxu0 0
  %565 = vmatpush1.bf16.msra.mxu0 0
  %566 = vmatprep.subr.bf16.mxu0 0
  %567 = vmatpush1.bf16.msra.mxu0 0
  %568 = vmatprep.subr.bf16.mxu0 0
  %569 = vmatpush1.bf16.msra.mxu0 0
  %570 = vmatprep.subr.bf16.mxu0 0
  %571 = vmatpush1.bf16.msra.mxu0 0
  %572 = vmatprep.subr.bf16.mxu0 0
  %573 = vmatpush1.bf16.msra.mxu0 0
  %574 = vmatprep.subr.bf16.mxu0 0
  %575 = vmatpush1.bf16.msra.mxu0 0
  %576 = vmatprep.subr.bf16.mxu0 0
  %577 = vmatpush1.bf16.msra.mxu0 0
  %578 = vmatprep.subr.bf16.mxu0 0
  %579 = vmatpush1.bf16.msra.mxu0 0
  %580 = vmatprep.subr.bf16.mxu0 0
  %581 = vmatpush1.bf16.msra.mxu0 0
  %582 = vmatprep.subr.bf16.mxu0 0
  %583 = vmatpush1.bf16.msra.mxu0 0
  %584 = vmatprep.subr.bf16.mxu0 0
  %585 = vmatpush1.bf16.msra.mxu0 0
  %586 = vmatprep.subr.bf16.mxu0 0
  %587 = vmatpush1.bf16.msra.mxu0 0
  %588 = vmatprep.subr.bf16.mxu0 0
  %589 = vmatpush1.bf16.msra.mxu0 0
  %590 = vmatprep.mubr.bf16.mxu0 0
  %591 = vmatmul.mubr.bf16.gmra.mrb[0].mxu0 %v556
  %v592 = vpop.f32.mrb[0].mxu0
  %v593 = vadd.f32 0.0, %v592
  %v594 = vpop.f32.mrb[0].mxu0
  %v595 = vpop.f32.mrb[0].mxu0
  %v596 = vpop.f32.mrb[0].mxu0
  %597 = vdwg.mxu0
  %v599 = vrot.slane %v593, 4
  %v600 = vrot.slane %v593, 5
  %v603 = vadd.f32 %v107, %v599
  %v604 = vadd.f32 %v112, %v600
  %v605 = vtanh.pop %v603
  %v606 = vtanh.pop %v604
  %v607 = vmul.f32 %v605, 0.5
  %v608 = vmul.f32 %v606, 0.5
  %v609 = vadd.f32 %v607, 0.5
  %v610 = vadd.f32 %v608, 0.5
  %v613 = vrot.slane %v529, 7
  %v614 = vrot.slane %v530, 7
  %v617 = vmul.f32 %v609, %v613
  %v618 = vmul.f32 %v610, %v614
  %621 = vrot.lane.b32.xlu0 %v605, 64
  %v622 = vpop.permute.xlu0 %621
  %623 = vrot.lane.b32.xlu0 %v606, 64
  %v624 = vpop.permute.xlu0 %623
  %v627 = vmul.f32 %v609, %v622
  %v628 = vmul.f32 %v610, %v624
  %631 = vrot.lane.b32.xlu0 %v627, 32
  %v632 = vpop.permute.xlu0 %631
  %633 = vrot.lane.b32.xlu0 %v628, 32
  %v634 = vpop.permute.xlu0 %633
  %v637 = vadd.f32 %v617, %v632
  %v638 = vadd.f32 %v618, %v634
  %v639 = vtanh.pop %v637
  %v640 = vtanh.pop %v638
  %643 = vrot.lane.b32.xlu0 %v639, 64
  %v644 = vpop.permute.xlu0 %643
  %645 = vrot.lane.b32.xlu0 %v640, 64
  %v646 = vpop.permute.xlu0 %645
  %v649 = vmul.f32 %v609, %v644
  %v650 = vmul.f32 %v610, %v646
  %v651 = vpack.c.bf16 %v649, %v649
  %v652 = vpack.c.bf16 %v650, %v650
  %v655 = vunpack.c.l.b16 %v651
  %v656 = vunpack.c.l.b16 %v652
  %v657 = vrot.slane %v655, 4
  %v658 = vrot.slane %v656, 3
  %v659 = vsel %vm228, %v658, %v657
  %v660 = vpack.c.b16 %v659, %v659
  %661 = vrot.lane.b32.xlu0 %v660, 32
  %v662 = vpop.permute.xlu0 %661
  %v664 = vsel %vm131, %v662, 0
  %666 = vmatprep.subr.bf16.mxu0 0
  %667 = vmatpush1.bf16.msra.mxu0 %v127
  %668 = vmatprep.subr.bf16.mxu0 0
  %669 = vmatpush1.bf16.msra.mxu0 %v128
  %670 = vmatprep.subr.bf16.mxu0 0
  %671 = vmatpush1.bf16.msra.mxu0 0
  %672 = vmatprep.subr.bf16.mxu0 0
  %673 = vmatpush1.bf16.msra.mxu0 0
  %674 = vmatprep.subr.bf16.mxu0 0
  %675 = vmatpush1.bf16.msra.mxu0 0
  %676 = vmatprep.subr.bf16.mxu0 0
  %677 = vmatpush1.bf16.msra.mxu0 0
  %678 = vmatprep.subr.bf16.mxu0 0
  %679 = vmatpush1.bf16.msra.mxu0 0
  %680 = vmatprep.subr.bf16.mxu0 0
  %681 = vmatpush1.bf16.msra.mxu0 0
  %682 = vmatprep.subr.bf16.mxu0 0
  %683 = vmatpush1.bf16.msra.mxu0 0
  %684 = vmatprep.subr.bf16.mxu0 0
  %685 = vmatpush1.bf16.msra.mxu0 0
  %686 = vmatprep.subr.bf16.mxu0 0
  %687 = vmatpush1.bf16.msra.mxu0 0
  %688 = vmatprep.subr.bf16.mxu0 0
  %689 = vmatpush1.bf16.msra.mxu0 0
  %690 = vmatprep.subr.bf16.mxu0 0
  %691 = vmatpush1.bf16.msra.mxu0 0
  %692 = vmatprep.subr.bf16.mxu0 0
  %693 = vmatpush1.bf16.msra.mxu0 0
  %694 = vmatprep.subr.bf16.mxu0 0
  %695 = vmatpush1.bf16.msra.mxu0 0
  %696 = vmatprep.subr.bf16.mxu0 0
  %697 = vmatpush1.bf16.msra.mxu0 0
  %698 = vmatprep.mubr.bf16.mxu0 0
  %699 = vmatmul.mubr.bf16.gmra.mrb[0].mxu0 %v664
  %v700 = vpop.f32.mrb[0].mxu0
  %v701 = vadd.f32 0.0, %v700
  %v702 = vpop.f32.mrb[0].mxu0
  %v703 = vpop.f32.mrb[0].mxu0
  %v704 = vpop.f32.mrb[0].mxu0
  %705 = vdwg.mxu0
  %v707 = vrot.slane %v701, 3
  %v708 = vrot.slane %v701, 4
  %v711 = vadd.f32 %v107, %v707
  %v712 = vadd.f32 %v112, %v708
  %v713 = vtanh.pop %v711
  %v714 = vtanh.pop %v712
  %v715 = vmul.f32 %v713, 0.5
  %v716 = vmul.f32 %v714, 0.5
  %v717 = vadd.f32 %v715, 0.5
  %v718 = vadd.f32 %v716, 0.5
  %v721 = vrot.slane %v637, 7
  %v722 = vrot.slane %v638, 7
  %v725 = vmul.f32 %v717, %v721
  %v726 = vmul.f32 %v718, %v722
  %729 = vrot.lane.b32.xlu0 %v713, 64
  %v730 = vpop.permute.xlu0 %729
  %731 = vrot.lane.b32.xlu0 %v714, 64
  %v732 = vpop.permute.xlu0 %731
  %v735 = vmul.f32 %v717, %v730
  %v736 = vmul.f32 %v718, %v732
  %739 = vrot.lane.b32.xlu0 %v735, 32
  %v740 = vpop.permute.xlu0 %739
  %741 = vrot.lane.b32.xlu0 %v736, 32
  %v742 = vpop.permute.xlu0 %741
  %v745 = vadd.f32 %v725, %v740
  %v746 = vadd.f32 %v726, %v742
  %v747 = vtanh.pop %v745
  %v748 = vtanh.pop %v746
  %751 = vrot.lane.b32.xlu0 %v747, 64
  %v752 = vpop.permute.xlu0 %751
  %753 = vrot.lane.b32.xlu0 %v748, 64
  %v754 = vpop.permute.xlu0 %753
  %v757 = vmul.f32 %v717, %v752
  %v758 = vmul.f32 %v718, %v754
  %v759 = vpack.c.bf16 %v757, %v757
  %v760 = vpack.c.bf16 %v758, %v758
  %v763 = vunpack.c.l.b16 %v759
  %v764 = vunpack.c.l.b16 %v760
  %v765 = vrot.slane %v763, 5
  %v766 = vrot.slane %v764, 4
  %v767 = vsel %vm228, %v766, %v765
  %v768 = vpack.c.b16 %v767, %v767
  %769 = vrot.lane.b32.xlu0 %v768, 32
  %v770 = vpop.permute.xlu0 %769
  %v772 = vsel %vm131, %v770, 0
  %774 = vmatprep.subr.bf16.mxu0 0
  %775 = vmatpush1.bf16.msra.mxu0 %v127
  %776 = vmatprep.subr.bf16.mxu0 0
  %777 = vmatpush1.bf16.msra.mxu0 %v128
  %778 = vmatprep.subr.bf16.mxu0 0
  %779 = vmatpush1.bf16.msra.mxu0 0
  %780 = vmatprep.subr.bf16.mxu0 0
  %781 = vmatpush1.bf16.msra.mxu0 0
  %782 = vmatprep.subr.bf16.mxu0 0
  %783 = vmatpush1.bf16.msra.mxu0 0
  %784 = vmatprep.subr.bf16.mxu0 0
  %785 = vmatpush1.bf16.msra.mxu0 0
  %786 = vmatprep.subr.bf16.mxu0 0
  %787 = vmatpush1.bf16.msra.mxu0 0
  %788 = vmatprep.subr.bf16.mxu0 0
  %789 = vmatpush1.bf16.msra.mxu0 0
  %790 = vmatprep.subr.bf16.mxu0 0
  %791 = vmatpush1.bf16.msra.mxu0 0
  %792 = vmatprep.subr.bf16.mxu0 0
  %793 = vmatpush1.bf16.msra.mxu0 0
  %794 = vmatprep.subr.bf16.mxu0 0
  %795 = vmatpush1.bf16.msra.mxu0 0
  %796 = vmatprep.subr.bf16.mxu0 0
  %797 = vmatpush1.bf16.msra.mxu0 0
  %798 = vmatprep.subr.bf16.mxu0 0
  %799 = vmatpush1.bf16.msra.mxu0 0
  %800 = vmatprep.subr.bf16.mxu0 0
  %801 = vmatpush1.bf16.msra.mxu0 0
  %802 = vmatprep.subr.bf16.mxu0 0
  %803 = vmatpush1.bf16.msra.mxu0 0
  %804 = vmatprep.subr.bf16.mxu0 0
  %805 = vmatpush1.bf16.msra.mxu0 0
  %806 = vmatprep.mubr.bf16.mxu0 0
  %807 = vmatmul.mubr.bf16.gmra.mrb[0].mxu0 %v772
  %v808 = vpop.f32.mrb[0].mxu0
  %v809 = vadd.f32 0.0, %v808
  %v810 = vpop.f32.mrb[0].mxu0
  %v811 = vpop.f32.mrb[0].mxu0
  %v812 = vpop.f32.mrb[0].mxu0
  %813 = vdwg.mxu0
  %v815 = vrot.slane %v809, 2
  %v816 = vrot.slane %v809, 3
  %v819 = vadd.f32 %v107, %v815
  %v820 = vadd.f32 %v112, %v816
  %v821 = vtanh.pop %v819
  %v822 = vtanh.pop %v820
  %v823 = vmul.f32 %v821, 0.5
  %v824 = vmul.f32 %v822, 0.5
  %v825 = vadd.f32 %v823, 0.5
  %v826 = vadd.f32 %v824, 0.5
  %v829 = vrot.slane %v745, 7
  %v830 = vrot.slane %v746, 7
  %v833 = vmul.f32 %v825, %v829
  %v834 = vmul.f32 %v826, %v830
  %837 = vrot.lane.b32.xlu0 %v821, 64
  %v838 = vpop.permute.xlu0 %837
  %839 = vrot.lane.b32.xlu0 %v822, 64
  %v840 = vpop.permute.xlu0 %839
  %v843 = vmul.f32 %v825, %v838
  %v844 = vmul.f32 %v826, %v840
  %847 = vrot.lane.b32.xlu0 %v843, 32
  %v848 = vpop.permute.xlu0 %847
  %849 = vrot.lane.b32.xlu0 %v844, 32
  %v850 = vpop.permute.xlu0 %849
  %v853 = vadd.f32 %v833, %v848
  %v854 = vadd.f32 %v834, %v850
  %v855 = vtanh.pop %v853
  %v856 = vtanh.pop %v854
  %859 = vrot.lane.b32.xlu0 %v855, 64
  %v860 = vpop.permute.xlu0 %859
  %861 = vrot.lane.b32.xlu0 %v856, 64
  %v862 = vpop.permute.xlu0 %861
  %v865 = vmul.f32 %v825, %v860
  %v866 = vmul.f32 %v826, %v862
  %v867 = vpack.c.bf16 %v865, %v865
  %v868 = vpack.c.bf16 %v866, %v866
  %v871 = vunpack.c.l.b16 %v867
  %v872 = vunpack.c.l.b16 %v868
  %v873 = vrot.slane %v871, 6
  %v874 = vrot.slane %v872, 5
  %v875 = vsel %vm228, %v874, %v873
  %v876 = vpack.c.b16 %v875, %v875
  %877 = vrot.lane.b32.xlu0 %v876, 32
  %v878 = vpop.permute.xlu0 %877
  %v880 = vsel %vm131, %v878, 0
  %882 = vmatprep.subr.bf16.mxu0 0
  %883 = vmatpush1.bf16.msra.mxu0 %v127
  %884 = vmatprep.subr.bf16.mxu0 0
  %885 = vmatpush1.bf16.msra.mxu0 %v128
  %886 = vmatprep.subr.bf16.mxu0 0
  %887 = vmatpush1.bf16.msra.mxu0 0
  %888 = vmatprep.subr.bf16.mxu0 0
  %889 = vmatpush1.bf16.msra.mxu0 0
  %890 = vmatprep.subr.bf16.mxu0 0
  %891 = vmatpush1.bf16.msra.mxu0 0
  %892 = vmatprep.subr.bf16.mxu0 0
  %893 = vmatpush1.bf16.msra.mxu0 0
  %894 = vmatprep.subr.bf16.mxu0 0
  %895 = vmatpush1.bf16.msra.mxu0 0
  %896 = vmatprep.subr.bf16.mxu0 0
  %897 = vmatpush1.bf16.msra.mxu0 0
  %898 = vmatprep.subr.bf16.mxu0 0
  %899 = vmatpush1.bf16.msra.mxu0 0
  %900 = vmatprep.subr.bf16.mxu0 0
  %901 = vmatpush1.bf16.msra.mxu0 0
  %902 = vmatprep.subr.bf16.mxu0 0
  %903 = vmatpush1.bf16.msra.mxu0 0
  %904 = vmatprep.subr.bf16.mxu0 0
  %905 = vmatpush1.bf16.msra.mxu0 0
  %906 = vmatprep.subr.bf16.mxu0 0
  %907 = vmatpush1.bf16.msra.mxu0 0
  %908 = vmatprep.subr.bf16.mxu0 0
  %909 = vmatpush1.bf16.msra.mxu0 0
  %910 = vmatprep.subr.bf16.mxu0 0
  %911 = vmatpush1.bf16.msra.mxu0 0
  %912 = vmatprep.subr.bf16.mxu0 0
  %913 = vmatpush1.bf16.msra.mxu0 0
  %914 = vmatprep.mubr.bf16.mxu0 0
  %915 = vmatmul.mubr.bf16.gmra.mrb[0].mxu0 %v880
  %v916 = vpop.f32.mrb[0].mxu0
  %v917 = vadd.f32 0.0, %v916
  %v918 = vpop.f32.mrb[0].mxu0
  %v919 = vpop.f32.mrb[0].mxu0
  %v920 = vpop.f32.mrb[0].mxu0
  %921 = vdwg.mxu0
  %v923 = vrot.slane %v917, 1
  %v924 = vrot.slane %v917, 2
  %v927 = vadd.f32 %v107, %v923
  %v928 = vadd.f32 %v112, %v924
  %v929 = vtanh.pop %v927
  %v930 = vtanh.pop %v928
  %v931 = vmul.f32 %v929, 0.5
  %v932 = vmul.f32 %v930, 0.5
  %v933 = vadd.f32 %v931, 0.5
  %v934 = vadd.f32 %v932, 0.5
  %v937 = vrot.slane %v853, 7
  %v938 = vrot.slane %v854, 7
  %v941 = vmul.f32 %v933, %v937
  %v942 = vmul.f32 %v934, %v938
  %945 = vrot.lane.b32.xlu0 %v929, 64
  %v946 = vpop.permute.xlu0 %945
  %947 = vrot.lane.b32.xlu0 %v930, 64
  %v948 = vpop.permute.xlu0 %947
  %v951 = vmul.f32 %v933, %v946
  %v952 = vmul.f32 %v934, %v948
  %955 = vrot.lane.b32.xlu0 %v951, 32
  %v956 = vpop.permute.xlu0 %955
  %957 = vrot.lane.b32.xlu0 %v952, 32
  %v958 = vpop.permute.xlu0 %957
  %v961 = vadd.f32 %v941, %v956
  %v962 = vadd.f32 %v942, %v958
  %v963 = vtanh.pop %v961
  %v964 = vtanh.pop %v962
  %967 = vrot.lane.b32.xlu0 %v963, 64
  %v968 = vpop.permute.xlu0 %967
  %969 = vrot.lane.b32.xlu0 %v964, 64
  %v970 = vpop.permute.xlu0 %969
  %v973 = vmul.f32 %v933, %v968
  %v974 = vmul.f32 %v934, %v970
  %v977 = vrot.slane %v220, 7
  %v978 = vsel %vm228, %v977, %v219
  %979 = vrot.lane.b32.xlu0 %v978, 32
  %v980 = vpop.permute.xlu0 %979
  %v984 = vrot.slane %v326, 1
  %v985 = vsel %vm228, %v327, %v984
  %986 = vrot.lane.b32.xlu0 %v985, 64
  %v987 = vpop.permute.xlu0 %986
  %v991 = vrot.slane %v433, 2
  %v992 = vrot.slane %v434, 1
  %v993 = vsel %vm228, %v992, %v991
  %994 = vrot.lane.b32.xlu0 %v993, 96
  %v995 = vpop.permute.xlu0 %994
  %v999 = vrot.slane %v541, 3
  %v1000 = vrot.slane %v542, 2
  %v1001 = vsel %vm228, %v1000, %v999
  %v1005 = vrot.slane %v649, 4
  %v1006 = vrot.slane %v650, 3
  %v1007 = vsel %vm228, %v1006, %v1005
  %1008 = vrot.lane.b32.xlu0 %v1007, 32
  %v1009 = vpop.permute.xlu0 %1008
  %v1013 = vrot.slane %v757, 5
  %v1014 = vrot.slane %v758, 4
  %v1015 = vsel %vm228, %v1014, %v1013
  %1016 = vrot.lane.b32.xlu0 %v1015, 64
  %v1017 = vpop.permute.xlu0 %1016
  %v1021 = vrot.slane %v865, 6
  %v1022 = vrot.slane %v866, 5
  %v1023 = vsel %vm228, %v1022, %v1021
  %1024 = vrot.lane.b32.xlu0 %v1023, 96
  %v1025 = vpop.permute.xlu0 %1024
  %v1029 = vrot.slane %v973, 7
  %v1030 = vrot.slane %v974, 6
  %v1031 = vsel %vm228, %v1030, %v1029
  %v1033 = vsel %vm131, %v980, %v987
  %vm1034 = vcmask 523264
  %v1035 = vsel %vm1034, %v1033, %v995
  %vm1036 = vcmask 785408
  %v1037 = vsel %vm1036, %v1035, %v1001
  %v1038 = vsel %vm131, %v1009, %v1017
  %v1039 = vsel %vm1034, %v1038, %v1025
  %v1040 = vsel %vm1036, %v1039, %v1031
  %v1043 = vcombine.low %v1037, %v1040
  %v1045 = vunpack.c.l.s4 1983009808
  %v1046 = vunpack.c.0.s8 %v1045
  %v1047 = vlaneseq
  %v1048 = vshrl.u32 %v1047, 7
  %v1049 = vsub.s32 %v1046, %v1048
  %v1050 = vrot.slane %v1043, %v1049
  %1052 = vst [vmem:[%s4] sm:$0xf] %v1050
  // Predicated region
  $region18: #{lstm_forward.1} parent=0 // pred_check
    _
  $region19: #{lstm_forward.1} parent=0 // pred_check_branch
    %1054 = sbr.rel (0) target = $region21
  $region20: #{lstm_forward.1} parent=0 // pred_region
    _
  $region21: #{lstm_forward.1} parent=0 // pred_fallthru
    _
  // Predicated region
  $region22: #{lstm_forward.1} parent=0 // pred_check
    _
  $region23: #{lstm_forward.1} parent=0 // pred_check_branch
    %1056 = sbr.rel (0) target = $region25
  $region24: #{lstm_forward.1} parent=0 // pred_region
    _
  $region25: #{lstm_forward.1} parent=0 // pred_fallthru
    _

</llo_original>
